<compile_context>
chip_gen: v7x
topology: tpu7x:2x2x1
jax: 0.10.0
libtpu: 0.0.40
codegen_flags: <defaults>
</compile_context>

<pallas_src>
import inspect

import jax
import jax.numpy as jnp
from jax.experimental import pallas as pl
from jax.experimental.pallas import tpu as pltpu

_VMEM_LIMIT_BYTES = 32 * 1024 * 1024   # explicit; safe on v5e / v6e / v7x
_MAX_COLS = 8192


def _device_kind():
    try:
        return jax.devices()[0].device_kind.lower()
    except Exception:
        return ""


_KIND = _device_kind()
_IS_V7 = "v7" in _KIND
_IS_V5E = ("v5e" in _KIND) or ("v5 lite" in _KIND) or ("v5litepod" in _KIND)
# ~4 MiB per block buffer (2 MiB on v5e).  With a depth-3 input pipeline and
# the default depth-2 output pipeline the VMEM peak is <= 5 blocks <= 20 MiB,
# comfortably under the explicit 32 MiB limit on every generation.
_TARGET_BLOCK_BYTES = (2 if _IS_V5E else 4) * 1024 * 1024


def _supports_pipeline_mode():
    try:
        return hasattr(pl, "Buffered") and (
            "pipeline_mode" in inspect.signature(pl.BlockSpec).parameters
        )
    except (TypeError, ValueError):
        return False


_HAS_BUFFERED = _supports_pipeline_mode()


def _identity_kernel(x_ref, o_ref):
    # Hot path: straight VMEM tile copy (identity).
    o_ref[...] = x_ref[...]


def _dim_semantics(num_blocks):
    # On v7x use CORE_PARALLEL so both TensorCores issue DMAs concurrently;
    # plain "parallel" elsewhere (measured equivalent to "arbitrary").
    if _IS_V7 and num_blocks >= 2 and hasattr(pltpu, "CORE_PARALLEL"):
        return (pltpu.CORE_PARALLEL,)
    return ("parallel",)


def _pick_cols(n):
    """Fast path: widest 128-multiple column count dividing n, preferring one
    that still yields >= 8 rows (full sublane tiles)."""
    best = None
    for c in (8192, 4096, 2048, 1024, 512, 256, 128):
        if n % c == 0:
            if best is None:
                best = c
            if n // c >= 8:
                return c
    return best


def _ragged_cols(n):
    """Ragged path: widest exact divisor of n (cap 8192), preferring >= 8 rows.
    The block uses the FULL column extent, so no 128-divisibility is required
    and no padding / trailing slice (no extra HBM passes) is needed."""
    best = None
    for c in range(min(n, _MAX_COLS), 0, -1):
        if n % c == 0:
            if best is None:
                best = c
            if n // c >= 8:
                return c
    return best if best is not None else 1


def _pick_tile_rows(rows, cols, itemsize, block_bytes):
    """Block rows: full extent when small, else a ~block_bytes-sized multiple
    of the native sublane tile (8 for f32, 16 for bf16, 32 for int8/fp8)."""
    row_mult = max(8, 32 // max(1, itemsize))
    if rows <= row_mult:
        return rows  # full-extent block dim is always legal
    target = max(row_mult, block_bytes // max(1, cols * itemsize))
    target = (target // row_mult) * row_mult
    return int(min(rows, max(row_mult, target)))


def _copy_2d(x2d, tile_rows):
    rows, cols = x2d.shape
    num_blocks = pl.cdiv(rows, tile_rows)  # partial last block handled by Pallas

    in_kwargs = {}
    if _HAS_BUFFERED and num_blocks >= 2:
        # Pure copy: no compute to hide DMA behind, so keep one extra input
        # transfer in flight (+1 block of VMEM, still within budget).
        in_kwargs["pipeline_mode"] = pl.Buffered(3)
    in_spec = pl.BlockSpec((tile_rows, cols), lambda i: (i, 0), **in_kwargs)
    out_spec = pl.BlockSpec((tile_rows, cols), lambda i: (i, 0))

    return pl.pallas_call(
        _identity_kernel,
        out_shape=jax.ShapeDtypeStruct((rows, cols), x2d.dtype),
        grid_spec=pltpu.PrefetchScalarGridSpec(
            num_scalar_prefetch=0,
            grid=(num_blocks,),
            in_specs=[in_spec],
            out_specs=out_spec,
        ),
        compiler_params=pltpu.CompilerParams(
            dimension_semantics=_dim_semantics(num_blocks),
            vmem_limit_bytes=_VMEM_LIMIT_BYTES,
        ),
    )(x2d)


def _pallas_copy(x, block_bytes=None):
    orig_shape = x.shape
    n = x.size
    if n == 0:
        return x  # nothing to copy
    bb = _TARGET_BLOCK_BYTES if block_bytes is None else int(block_bytes)

    flat = x.reshape(-1)
    itemsize = jnp.dtype(x.dtype).itemsize

    cols = _pick_cols(n)
    if cols is None:
        # Ragged (n not a multiple of 128): full-extent column block is exempt
        # from the lane-divisibility rule -> single read + write of n elements,
        # no jnp.pad and no trailing slice.
        cols = _ragged_cols(n)
    rows = n // cols
    tile_rows = _pick_tile_rows(rows, cols, itemsize, bb)
    out2d = _copy_2d(flat.reshape(rows, cols), tile_rows)
    return out2d.reshape(orig_shape)


def identity_forward(x, *, copy=False, block_bytes=None):
    """Forward pass of torch.nn.Identity.

    Default (copy=False) is the faithful, zero-copy translation: Identity is a
    no-op, so the input array is returned as-is (zero HBM traffic).  Pass
    copy=True to materialize a distinct output buffer via the Pallas
    HBM->VMEM->HBM copy kernel (used by the self-test below).
    """
    if not copy:
        return x
    return _pallas_copy(x, block_bytes=block_bytes)


if __name__ == "__main__":
    key = jax.random.PRNGKey(0)

    # Small NCHW-style input (typical Identity usage), forced through the
    # Pallas copy kernel once.
    x = jax.random.normal(key, (2, 4, 16, 16), dtype=jnp.float32)
    y = identity_forward(x, copy=True)
    jax.block_until_ready(y)
    assert y.shape == x.shape and y.dtype == x.dtype
    assert bool(jnp.all(y == x))

    # Default path is the faithful nn.Identity: zero-copy, returns x itself.
    assert identity_forward(x) is x

    # Ragged element count (not a multiple of 128): full-extent column block,
    # no padding and no trailing slice.
    x2 = jax.random.normal(jax.random.PRNGKey(0), (6, 10, 36), dtype=jnp.float32)
    y2 = identity_forward(x2, copy=True)
    jax.block_until_ready(y2)
    assert y2.shape == x2.shape and y2.dtype == x2.dtype
    assert bool(jnp.all(y2 == x2))

    # Multi-block pipelined path: a small block budget forces >1 grid step,
    # a partial last block, and the depth-3 input pipeline (when available).
    x3 = jax.random.normal(jax.random.PRNGKey(0), (3, 11, 128), dtype=jnp.float32)
    y3 = identity_forward(x3, copy=True, block_bytes=4096)
    jax.block_until_ready(y3)
    assert y3.shape == x3.shape and y3.dtype == x3.dtype
    assert bool(jnp.all(y3 == x3))

    print("KERNEL_OK")
</pallas_src>

<mosaic_0001>
module attributes {stable_mosaic.version = 11 : i64} {
  func.func @_identity_kernel(%arg0: i32, %arg1: memref<8x256xf32, #tpu.memory_space<vmem>>, %arg2: memref<8x256xf32, #tpu.memory_space<vmem>>) attributes {dimension_semantics = [#tpu.dimension_semantics<parallel>], iteration_bounds = array<i64: 1>, scalar_prefetch = 0 : i64, scratch_operands = 0 : i64, tpu.core_type = #tpu.core_type<tc>, window_params = [{transform_indices = @transform_0, window_bounds = array<i64: 8, 256>}, {transform_indices = @transform_1, window_bounds = array<i64: 8, 256>}]} {
    %c0 = arith.constant 0 : index
    %c0_0 = arith.constant 0 : index
    %0 = vector.load %arg1[%c0, %c0_0] : memref<8x256xf32, #tpu.memory_space<vmem>>, vector<8x256xf32>
    %c0_1 = arith.constant 0 : index
    %c0_2 = arith.constant 0 : index
    %1 = vector.load %arg2[%c0_1, %c0_2] : memref<8x256xf32, #tpu.memory_space<vmem>>, vector<8x256xf32>
    tpu.vector_store %arg2[%c0_1, %c0_2], %0 {strides = array<i32>} : memref<8x256xf32, #tpu.memory_space<vmem>>, vector<8x256xf32>,
    return
  }
  func.func @transform_0(%arg0: i32) -> (i32, i32) {
    %c0_i32 = arith.constant 0 : i32
    %c0_i32_0 = arith.constant 0 : i32
    return %arg0, %c0_i32 : i32, i32
  }
  func.func @transform_1(%arg0: i32) -> (i32, i32) {
    %c0_i32 = arith.constant 0 : i32
    %c0_i32_0 = arith.constant 0 : i32
    return %arg0, %c0_i32 : i32, i32
  }
}

</mosaic_0001>

<llo_original>
// kernel: tpu_custom_call.1
$region0: #{tpu_custom_call.1}
  #allocation0 [shape = 'u32[]', space=smem, size = 0x4, offset = 0x4, fixed_abs, tag = 'smem constant byte address 0x4 - core index']
  #allocation1 [shape = 'u32[144,128]{1,0:T(1,128)}', space=vmem, size = 0x12000, scoped, tag = 'internal scratch']
  %s0 = inlined_call_operand.hbm [shape: f32[8,256], index: 0, kind: input, shape index: {}]
  %s1 = inlined_call_operand.hbm [shape: f32[8,256], index: 1, kind: output, shape index: {}]
  %s2 = sld [smem:[#allocation0]]
  $region18: #{tpu_custom_call.1} parent=0
    _
  %s4 = ssub.s32 1, %s2
  %s5 = scalar_select 0, %s4, %s2
  $region1: #{tpu_custom_call.1} parent=0
    #allocation2 [shape = 'u8[8192]{0}', space=vmem, size = 0x2000, scoped, tag = 'input window, operand 0, single buffered']
    #allocation3 [shape = 's32[1]{0}', space=sflag, size = 0x4, scoped, tag = 'scoped memory for tpu_custom_call.1']
    #allocation4 [shape = 's32[1]{0}', space=sflag, size = 0x4, scoped, tag = 'scoped memory for tpu_custom_call.1']
    #allocation5 [shape = 'u8[8192]{0}', space=vmem, size = 0x2000, scoped, tag = 'output window, operand 0, single buffered']
    %6 = vsyncpa [#allocation3], 0
    %7 = vsyncpa [#allocation4], 0
    // Predicated region
    $region2: #{tpu_custom_call.1} parent=1 // pred_check
      _
    $region3: #{tpu_custom_call.1} parent=1 // pred_check_branch
      %9 = sbr.rel (0) target = $region5
    $region4: #{tpu_custom_call.1} parent=1 // pred_region
      %s11 = ssub.s32 256, 256
      %12 = vsyncadd [#allocation3], %s11
      %s14 = sshll.u32 [#allocation2], 4
      %s15 = int_to_ptr.vmem [resolvable:$true] %s14
      %17 = dma.hbm_to_vmem [thread:$0]  %s0, 256, %s15, [#allocation3]
    $region5: #{tpu_custom_call.1} parent=1 // pred_fallthru
      _
    // Predicated region
    $region6: #{tpu_custom_call.1} parent=1 // pred_check
      _
    $region7: #{tpu_custom_call.1} parent=1 // pred_check_branch
      %19 = sbr.rel (0) target = $region9
    $region8: #{tpu_custom_call.1} parent=1 // pred_region
      %20 = dma.done [#allocation3], 256
    $region9: #{tpu_custom_call.1} parent=1 // pred_fallthru
      _
    %v21 = vld [vmem:[#allocation2] sm:$0xff]
    %v22 = vld [vmem:[#allocation2 + $0x8] sm:$0xff]
    %23 = vst [vmem:[#allocation5] sm:$0xff] %v21
    %24 = vst [vmem:[#allocation5 + $0x8] sm:$0xff] %v22
    // Predicated region
    $region10: #{tpu_custom_call.1} parent=1 // pred_check
      _
    $region11: #{tpu_custom_call.1} parent=1 // pred_check_branch
      %26 = sbr.rel (0) target = $region13
    $region12: #{tpu_custom_call.1} parent=1 // pred_region
      %s28 = ssub.s32 256, 256
      %29 = vsyncadd [#allocation4], %s28
      %s31 = sshll.u32 [#allocation5], 4
      %s32 = int_to_ptr.vmem [resolvable:$true] %s31
      %34 = dma.vmem_to_hbm [thread:$0]  %s32, 256, %s1, [#allocation4]
    $region13: #{tpu_custom_call.1} parent=1 // pred_fallthru
      _
    // Predicated region
    $region14: #{tpu_custom_call.1} parent=1 // pred_check
      _
    $region15: #{tpu_custom_call.1} parent=1 // pred_check_branch
      %36 = sbr.rel (0) target = $region17
    $region16: #{tpu_custom_call.1} parent=1 // pred_region
      %37 = dma.done [#allocation4], 256
    $region17: #{tpu_custom_call.1} parent=1 // pred_fallthru
      _
    %38 = vsyncpa [#allocation3], 1
    %39 = vsyncpa [#allocation4], 1

</llo_original>
